<compile_context>
chip_gen: v5e
topology: v5e:2x2
jax: 0.10.0
libtpu: 0.0.40
codegen_flags: <defaults>
</compile_context>

<pallas_src>
import functools

import jax
import jax.numpy as jnp
from jax.experimental import pallas as pl
from jax.experimental.pallas import tpu as pltpu


def _round_up(x, m):
    return (x + m - 1) // m * m


# ---------------------------------------------------------------------------
# Pallas kernel: one M-tile of   out = cols @ w + bias
# ---------------------------------------------------------------------------

def _patch_embed_kernel(x_ref, w_ref, b_ref, o_ref):
    # MXU matmul: bf16 operands, f32 accumulation.
    acc = jnp.dot(x_ref[...], w_ref[...], preferred_element_type=jnp.float32)
    # Bias epilogue in f32 (VPU), then cast to the output dtype.
    # embed_dim % 128 == 0 -> unmasked, lane-dense stores.
    o_ref[...] = (acc + b_ref[...]).astype(o_ref.dtype)


def _choose_block_m(M, requested):
    """Pick the M-tile: multiple of 16 (bf16 sublanes), >= ~8 grid steps."""
    bm = max(16, min(_round_up(requested, 16), _round_up(M, 16)))
    # Keep >= ~8 grid steps so v7x's two TensorCores each see >= 4 pipelined
    # steps (the grid axis is 'parallel'); harmless on single-TC v5e/v6e.
    cap = max(16, _round_up(pl.cdiv(M, 8), 16))
    bm = min(bm, cap)
    # 256-aligned M tiles feed the 2x256^2 MXU on v6e/v7x without partial passes.
    if bm >= 256:
        bm = (bm // 256) * 256
    return bm


def _patch_matmul(cols, w2d, bias, *, block_m, out_dtype):
    """cols: (M, K) bf16, w2d: (K, N) bf16, bias: (1, N) f32 -> (M, N) out_dtype."""
    M, K = cols.shape
    N = w2d.shape[1]

    block_m = _choose_block_m(M, block_m)
    grid = (pl.cdiv(M, block_m),)   # partial last block masked by Pallas; no pad/slice

    # The weight uses a constant index_map and is DMA'd once; when it is big,
    # single-buffer it (no point double-buffering a block that never changes).
    weight_bytes = K * N * 2
    w_kwargs = {}
    if weight_bytes > 4 * 1024 * 1024:
        w_kwargs = dict(pipeline_mode=pl.Buffered(1))

    out_bytes = jnp.dtype(out_dtype).itemsize
    # Double-buffered activation + output tiles, (at most) double-buffered
    # weight, tiny bias. Cap at 48 MiB to leave headroom on v7x (64 MiB/TC).
    vmem_est = (2 * block_m * K * 2
                + 2 * block_m * N * out_bytes
                + 2 * weight_bytes
                + 2 * N * 4)
    vmem_limit = int(min(max(2 * vmem_est, 16 * 1024 * 1024), 48 * 1024 * 1024))

    return pl.pallas_call(
        _patch_embed_kernel,
        out_shape=jax.ShapeDtypeStruct((M, N), out_dtype),
        grid_spec=pltpu.PrefetchScalarGridSpec(
            num_scalar_prefetch=0,
            grid=grid,
            in_specs=[
                # activations: a new (block_m, K) tile per grid step (pipelined)
                pl.BlockSpec((block_m, K), lambda i: (i, 0)),
                # weight + bias: constant block index -> DMA'd once, VMEM-resident
                pl.BlockSpec((K, N), lambda i: (0, 0), **w_kwargs),
                pl.BlockSpec((1, N), lambda i: (0, 0)),
            ],
            out_specs=pl.BlockSpec((block_m, N), lambda i: (i, 0)),
        ),
        compiler_params=pltpu.CompilerParams(
            dimension_semantics=("parallel",),      # megacore sharding on v7x
            vmem_limit_bytes=vmem_limit,
        ),
        cost_estimate=pl.CostEstimate(
            flops=2 * M * K * N,
            transcendentals=0,
            bytes_accessed=M * K * 2 + K * N * 2 + N * 4 + M * N * out_bytes,
        ),
    )(cols, w2d, bias)


# ---------------------------------------------------------------------------
# Forward pass (PatchEmbed.forward semantics)
# ---------------------------------------------------------------------------

def patch_embed_forward(params, x_nchw, *, block_m=512, out_dtype=jnp.bfloat16):
    """(B, C, H, W) NCHW -> (B, num_patches, embed_dim)."""
    w, b = params["proj_w"], params["proj_b"]           # (E, C, pH, pW), (E,)
    E, C, pH, pW = w.shape
    B, C_in, H, W = x_nchw.shape
    assert C_in == C
    Hp, Wp = H // pH, W // pW

    # Conv2d with stride == kernel only covers complete windows.
    x = x_nchw[:, :, : Hp * pH, : Wp * pW]

    # Patch extraction == ONE layout transpose (stride == kernel, so every
    # element is read exactly once, no im2col blow-up). The bf16 cast sits on
    # the same value chain so XLA fuses it into the transpose: one HBM pass,
    # f32 read -> bf16 cols write. If the producer already emits bf16, reuse it.
    xb = x if x.dtype == jnp.bfloat16 else x.astype(jnp.bfloat16)
    cols = xb.reshape(B, C, Hp, pH, Wp, pW)
    cols = cols.transpose(0, 2, 4, 1, 3, 5)              # (B, Hp, Wp, C, pH, pW)
    cols = cols.reshape(B * Hp * Wp, C * pH * pW)        # rows ordered (b, hp, wp)

    # PyTorch conv weight (E, C, pH, pW) -> (K, E); same (c, ph, pw) flat order.
    w2d = w.reshape(E, C * pH * pW).T.astype(jnp.bfloat16)
    bias = b.reshape(1, E).astype(jnp.float32)

    # Keep the reduction (lane) dim unmasked: zero-pad K to a 128 multiple once
    # in the wrapper (no numerical effect). No-op when K % 128 == 0 (e.g. ViT-B).
    K = cols.shape[1]
    Kp = _round_up(K, 128)
    if Kp != K:
        cols = jnp.pad(cols, ((0, 0), (0, Kp - K)))
        w2d = jnp.pad(w2d, ((0, Kp - K), (0, 0)))

    out = _patch_matmul(cols, w2d, bias, block_m=block_m, out_dtype=out_dtype)
    # Row order (b, hp, wp) == Conv2d output .flatten(2).transpose(1, 2).
    return out.reshape(B, Hp * Wp, E)


# ---------------------------------------------------------------------------
# Deterministic synthetic params (shapes follow nn.Conv2d of the module)
# ---------------------------------------------------------------------------

def init_patch_embed(key, in_chans, embed_dim, patch_size):
    pH, pW = patch_size
    kw, kb = jax.random.split(key)
    fan_in = in_chans * pH * pW
    w = jax.random.normal(kw, (embed_dim, in_chans, pH, pW),
                          jnp.float32) / jnp.sqrt(fan_in)
    b = 0.01 * jax.random.normal(kb, (embed_dim,), jnp.float32)
    return {"proj_w": w, "proj_b": b}


# Pure-JAX reference (same bf16 operand rounding) for a correctness check.
def _reference(params, x_nchw):
    w = params["proj_w"].astype(jnp.bfloat16).astype(jnp.float32)
    b = params["proj_b"].astype(jnp.float32)
    x = x_nchw.astype(jnp.bfloat16).astype(jnp.float32)
    pH, pW = w.shape[2], w.shape[3]
    y = jax.lax.conv_general_dilated(
        x, w, window_strides=(pH, pW), padding="VALID",
        dimension_numbers=("NCHW", "OIHW", "NCHW"))
    y = y + b[None, :, None, None]
    B, E, Hp, Wp = y.shape
    return y.reshape(B, E, Hp * Wp).transpose(0, 2, 1)


# ---------------------------------------------------------------------------

if __name__ == "__main__":
    key = jax.random.PRNGKey(0)
    kx, kp = jax.random.split(key)

    # Small shapes consistent with the module (scaled-down ViT patch embed).
    B, C, H, W = 2, 4, 32, 32
    patch = (8, 8)
    embed_dim = 128                      # multiple of 128 -> lane-dense output

    x = jax.random.normal(kx, (B, C, H, W), jnp.float32)
    params = init_patch_embed(kp, C, embed_dim, patch)

    # M = B*num_patches = 32; block_m auto-caps to 16 -> 2 grid steps, which
    # still exercises the M pipeline, the resident weight, and the parallel
    # dimension semantics.
    fwd = jax.jit(functools.partial(patch_embed_forward, params))
    out = fwd(x)
    jax.block_until_ready(out)

    num_patches = (H // patch[0]) * (W // patch[1])
    assert out.shape == (B, num_patches, embed_dim), out.shape
    out_f32 = out.astype(jnp.float32)
    assert bool(jnp.all(jnp.isfinite(out_f32)))

    ref = _reference(params, x)
    max_err = float(jnp.max(jnp.abs(out_f32 - ref)))
    assert max_err < 5e-2, max_err

    print("KERNEL_OK")
</pallas_src>

<mosaic_0001>
module attributes {stable_mosaic.version = 11 : i64} {
  func.func @_patch_embed_kernel(%arg0: i32, %arg1: memref<16x256xbf16, #tpu.memory_space<vmem>>, %arg2: memref<256x128xbf16, #tpu.memory_space<vmem>>, %arg3: memref<1x128xf32, #tpu.memory_space<vmem>>, %arg4: memref<16x128xbf16, #tpu.memory_space<vmem>>) attributes {dimension_semantics = [#tpu.dimension_semantics<parallel>], iteration_bounds = array<i64: 2>, scalar_prefetch = 0 : i64, scratch_operands = 0 : i64, tpu.core_type = #tpu.core_type<tc>, window_params = [{transform_indices = @transform_0, window_bounds = array<i64: 16, 256>}, {pipeline_mode = #tpu.pipeline_mode<synchronous>, transform_indices = @transform_1, window_bounds = array<i64: 256, 128>}, {pipeline_mode = #tpu.pipeline_mode<synchronous>, transform_indices = @transform_2, window_bounds = array<i64: 1, 128>}, {transform_indices = @transform_3, window_bounds = array<i64: 16, 128>}]} {
    %c0 = arith.constant 0 : index
    %c0_0 = arith.constant 0 : index
    %0 = vector.load %arg1[%c0, %c0_0] : memref<16x256xbf16, #tpu.memory_space<vmem>>, vector<16x256xbf16>
    %c0_1 = arith.constant 0 : index
    %c0_2 = arith.constant 0 : index
    %1 = vector.load %arg2[%c0_1, %c0_2] : memref<256x128xbf16, #tpu.memory_space<vmem>>, vector<256x128xbf16>
    %cst = arith.constant dense<0.000000e+00> : vector<16x128xf32>
    %2 = tpu.matmul %0, %1, %cst {dimension_numbers = #tpu.dot_dimension_numbers<[1], [0], [0], [1], [0, 0, 1, 1], [], []>} : vector<16x256xbf16>, vector<256x128xbf16>, vector<16x128xf32> -> vector<16x128xf32>
    %c0_3 = arith.constant 0 : index
    %c0_4 = arith.constant 0 : index
    %3 = vector.load %arg3[%c0_3, %c0_4] : memref<1x128xf32, #tpu.memory_space<vmem>>, vector<1x128xf32>
    %4 = vector.broadcast %3 : vector<1x128xf32> to vector<16x128xf32>
    %5 = arith.addf %2, %4 : vector<16x128xf32>
    %6 = arith.truncf %5 : vector<16x128xf32> to vector<16x128xbf16>
    %c0_5 = arith.constant 0 : index
    %c0_6 = arith.constant 0 : index
    %7 = vector.load %arg4[%c0_5, %c0_6] : memref<16x128xbf16, #tpu.memory_space<vmem>>, vector<16x128xbf16>
    tpu.vector_store %arg4[%c0_5, %c0_6], %6 {strides = array<i32>} : memref<16x128xbf16, #tpu.memory_space<vmem>>, vector<16x128xbf16>,
    return
  }
  func.func @transform_0(%arg0: i32) -> (i32, i32) {
    %c0_i32 = arith.constant 0 : i32
    %c0_i32_0 = arith.constant 0 : i32
    return %arg0, %c0_i32 : i32, i32
  }
  func.func @transform_1(%arg0: i32) -> (i32, i32) {
    %c0_i32 = arith.constant 0 : i32
    %c0_i32_0 = arith.constant 0 : i32
    %c0_i32_1 = arith.constant 0 : i32
    return %c0_i32, %c0_i32_0 : i32, i32
  }
  func.func @transform_2(%arg0: i32) -> (i32, i32) {
    %c0_i32 = arith.constant 0 : i32
    %c0_i32_0 = arith.constant 0 : i32
    %c0_i32_1 = arith.constant 0 : i32
    return %c0_i32, %c0_i32_0 : i32, i32
  }
  func.func @transform_3(%arg0: i32) -> (i32, i32) {
    %c0_i32 = arith.constant 0 : i32
    %c0_i32_0 = arith.constant 0 : i32
    return %arg0, %c0_i32 : i32, i32
  }
}

</mosaic_0001>

<llo_original>
// kernel: patch_embed_forward.1
$region0: #{patch_embed_forward.1}
  #allocation0 [shape = 'u32[]', space=smem, size = 0x4, offset = 0x4, fixed_abs, tag = 'smem constant byte address 0x4 - core index']
  #allocation1 [shape = 'u32[72,128]{1,0:T(1,128)}', space=vmem, size = 0x9000, scoped, tag = 'internal scratch']
  %s0 = inlined_call_operand.vmem [shape: bf16[32,256], index: 0, kind: input, shape index: {}]
  %s1 = inlined_call_operand.vmem [shape: bf16[256,128], index: 1, kind: input, shape index: {}]
  %s2 = inlined_call_operand.vmem [shape: f32[1,128], index: 2, kind: input, shape index: {}]
  %s3 = inlined_call_operand.hbm [shape: bf16[32,128], index: 3, kind: output, shape index: {}]
  %s4 = sld [smem:[#allocation0]]
  $region45: #{patch_embed_forward.1} parent=0
    _
  %s6 = ssub.s32 1, %s4
  %s7 = scalar_select 0, %s6, %s4
  $region1: #{patch_embed_forward.1} parent=0
    #allocation2 [shape = 'u8[8192]{0}', space=vmem, size = 0x2000, scoped, tag = 'output window, operand 0']
    #allocation3 [shape = 's32[2]{0}', space=sflag, size = 0x8, scoped, tag = 'scoped memory for patch_embed_forward.1']
    %8 = vsyncpa [#allocation3], 0
    %s9 = scalar_lea.sflag [#allocation3], 1
    %10 = vsyncpa %s9, 0
    loop: start=0, step=1, limit=4
    $region2: #{patch_embed_forward.1} parent=1 // loop_pre_header
      _
    $region3: #{patch_embed_forward.1} parent=1 // loop_header
      %s12 = sphi 0, %s16
      %p13 = scmp.ge.s32.totalorder %s12, 4
      %s22 = sphi 0, %s24
      %s25 = sphi 0, %s22
      %s26 = sphi 0, %s25
      %s42 = sphi 0, %s26
      %s46 = sphi 0, %s46
      %s48 = sphi 0, %s46
      %s49 = sphi 0, %s48
      %s63 = sphi 0, %s49
      %s67 = sphi 0, %s67
      %s69 = sphi 0, %s67
      %s70 = sphi 0, %s69
      %s84 = sphi 0, %s70
      %s90 = sphi 0, %s92
      %s93 = sphi 0, %s90
      %s94 = sphi 0, %s93
      %s110 = sphi 0, %s94
    $region4: #{patch_embed_forward.1} parent=1 // loop_header_branch
      %15 = sbr.rel (%p13) target = $region8
    $region5: #{patch_embed_forward.1} parent=1 // loop_body
      %s17 = ssub.s32 %s12, 1
      %s18 = ssub.s32 %s12, 2
      %s19 = sadd.s32 %s12, 1
      %s20 = ssub.s32 %s12, %s19
      %p21 = scmp.eq.s32.totalorder %s20, 0
      %s23 = sadd.s32 %s22, 1
      %s24 = scalar_select %p21, %s22, %s23
      %p27 = pneg %p21
      %p28 = scmp.eq.s32.totalorder %s12, 1
      %p29 = por %p27, %p28
      %p30 = scmp.ne.s32.totalorder %s22, %s25
      %p31 = scmp.eq.s32.totalorder %s12, 0
      %p32 = por %p30, %p31
      %p33 = scmp.ne.s32.totalorder %s22, %s25
      %p34 = scmp.eq.s32.totalorder %s17, 1
      %p35 = por %p33, %p34
      %p36 = scmp.ne.s32.totalorder %s25, %s26
      %p37 = scmp.eq.s32.totalorder %s17, 0
      %p38 = por %p36, %p37
      %p39 = scmp.ne.s32.totalorder %s25, %s26
      %p40 = scmp.eq.s32.totalorder %s18, 1
      %p41 = por %p39, %p40
      %p43 = scmp.ne.s32.totalorder %s26, %s42
      %p44 = scmp.eq.s32.totalorder %s18, 0
      %p45 = por %p43, %p44
      %s47 = sadd.s32 %s46, 1
      %p50 = scmp.eq.s32.totalorder %s12, 1
      %p51 = scmp.ne.s32.totalorder %s46, %s48
      %p52 = scmp.eq.s32.totalorder %s12, 0
      %p53 = por %p51, %p52
      %p54 = scmp.ne.s32.totalorder %s46, %s48
      %p55 = scmp.eq.s32.totalorder %s17, 1
      %p56 = por %p54, %p55
      %p57 = scmp.ne.s32.totalorder %s48, %s49
      %p58 = scmp.eq.s32.totalorder %s17, 0
      %p59 = por %p57, %p58
      %p60 = scmp.ne.s32.totalorder %s48, %s49
      %p61 = scmp.eq.s32.totalorder %s18, 1
      %p62 = por %p60, %p61
      %p64 = scmp.ne.s32.totalorder %s49, %s63
      %p65 = scmp.eq.s32.totalorder %s18, 0
      %p66 = por %p64, %p65
      %s68 = sadd.s32 %s67, 1
      %p71 = scmp.eq.s32.totalorder %s12, 1
      %p72 = scmp.ne.s32.totalorder %s67, %s69
      %p73 = scmp.eq.s32.totalorder %s12, 0
      %p74 = por %p72, %p73
      %p75 = scmp.ne.s32.totalorder %s67, %s69
      %p76 = scmp.eq.s32.totalorder %s17, 1
      %p77 = por %p75, %p76
      %p78 = scmp.ne.s32.totalorder %s69, %s70
      %p79 = scmp.eq.s32.totalorder %s17, 0
      %p80 = por %p78, %p79
      %p81 = scmp.ne.s32.totalorder %s69, %s70
      %p82 = scmp.eq.s32.totalorder %s18, 1
      %p83 = por %p81, %p82
      %p85 = scmp.ne.s32.totalorder %s70, %s84
      %p86 = scmp.eq.s32.totalorder %s18, 0
      %p87 = por %p85, %p86
      %s88 = ssub.s32 %s12, %s19
      %p89 = scmp.eq.s32.totalorder %s88, 0
      %s91 = sadd.s32 %s90, 1
      %s92 = scalar_select %p89, %s90, %s91
      %p95 = pneg %p89
      %p96 = scmp.eq.s32.totalorder %s12, 1
      %p97 = por %p95, %p96
      %p98 = scmp.ne.s32.totalorder %s90, %s93
      %p99 = scmp.eq.s32.totalorder %s12, 0
      %p100 = por %p98, %p99
      %p101 = scmp.ne.s32.totalorder %s90, %s93
      %p102 = scmp.eq.s32.totalorder %s17, 1
      %p103 = por %p101, %p102
      %p104 = scmp.ne.s32.totalorder %s93, %s94
      %p105 = scmp.eq.s32.totalorder %s17, 0
      %p106 = por %p104, %p105
      %p107 = scmp.ne.s32.totalorder %s93, %s94
      %p108 = scmp.eq.s32.totalorder %s18, 1
      %p109 = por %p107, %p108
      %p111 = scmp.ne.s32.totalorder %s94, %s110
      %p112 = scmp.eq.s32.totalorder %s18, 0
      %p113 = por %p111, %p112
      %p114 = scmp.le.s32.totalorder 1, %s12
      %p115 = scmp.lt.s32.totalorder %s12, 3
      %p116 = pnand %p114, %p115
      %p117 = pneg %p116
      // Predicated region
      $region9: #{patch_embed_forward.1} parent=5 // pred_check
        _
      $region10: #{patch_embed_forward.1} parent=5 // pred_check_branch
        %119 = sbr.rel (%p116) target = $region12
      $region11: #{patch_embed_forward.1} parent=5 // pred_region
        %s120 = ssub.s32 %s12, 1
        // Predicated region
        $region13: #{patch_embed_forward.1} parent=11 // pred_check
          %p121 = pneg %p59
        $region14: #{patch_embed_forward.1} parent=11 // pred_check_branch
          %123 = sbr.rel (%p121) target = $region16
        $region15: #{patch_embed_forward.1} parent=11 // pred_region
          _
        $region16: #{patch_embed_forward.1} parent=11 // pred_fallthru
          _
        // Predicated region
        $region17: #{patch_embed_forward.1} parent=11 // pred_check
          %p124 = pneg %p80
        $region18: #{patch_embed_forward.1} parent=11 // pred_check_branch
          %126 = sbr.rel (%p124) target = $region20
        $region19: #{patch_embed_forward.1} parent=11 // pred_region
          _
        $region20: #{patch_embed_forward.1} parent=11 // pred_fallthru
          _
      $region12: #{patch_embed_forward.1} parent=5 // pred_fallthru
        _
      %p127 = scmp.lt.s32.totalorder %s12, 2
      // Predicated region
      $region21: #{patch_embed_forward.1} parent=5 // pred_check
        %p128 = pneg %p127
      $region22: #{patch_embed_forward.1} parent=5 // pred_check_branch
        %130 = sbr.rel (%p128) target = $region24
      $region23: #{patch_embed_forward.1} parent=5 // pred_region
        // Predicated region
        $region25: #{patch_embed_forward.1} parent=23 // pred_check
          %p131 = pneg %p32
        $region26: #{patch_embed_forward.1} parent=23 // pred_check_branch
          %133 = sbr.rel (%p131) target = $region28
        $region27: #{patch_embed_forward.1} parent=23 // pred_region
          %s134 = smul.u32 2, %s12
          %p135 = scmp.lt.s32.totalorder %s134, 3
          %s136 = scalar_select %p135, %s134, 3
          %s137 = smul.addr %s136, 2
          %s138 = smul.addr %s137, 4
          %s139 = scalar_lea.vmem %s0, %s138
          %s140 = smul.u32 2, %s12
        $region28: #{patch_embed_forward.1} parent=23 // pred_fallthru
          _
      $region24: #{patch_embed_forward.1} parent=5 // pred_fallthru
        _
      %p141 = scmp.le.s32.totalorder 1, %s12
      %p142 = scmp.lt.s32.totalorder %s12, 3
      %p143 = pnand %p141, %p142
      %p144 = pneg %p143
      // Predicated region
      $region29: #{patch_embed_forward.1} parent=5 // pred_check
        _
      $region30: #{patch_embed_forward.1} parent=5 // pred_check_branch
        %146 = sbr.rel (%p143) target = $region32
      $region31: #{patch_embed_forward.1} parent=5 // pred_region
        %s147 = ssub.s32 %s12, 1
        %s148 = smul.u32 2, %s17
        %p149 = scmp.lt.s32.totalorder %s148, 3
        %s150 = scalar_select %p149, %s148, 3
        %s151 = smul.addr %s150, 2
        %s152 = smul.addr %s151, 4
        %s153 = scalar_lea.vmem %s0, %s152
        %p154 = pneg %p38
        %p155 = pneg %p35
        %p156 = pneg %p59
        %p157 = pneg %p56
        %p158 = pneg %p80
        %p159 = pneg %p77
        %p160 = pneg %p106
        %p161 = pneg %p103
        %s162 = sand.u32 %s93, 1
        %s163 = scalar_lea.sflag [#allocation3], %s162
        %s164 = sand.u32 %s93, 1
        %s165 = smul.addr %s164, 8
        %s166 = scalar_lea.vmem [#allocation2], %s165
        %s167 = smul.u32 2, %s17
        %p168 = scmp.lt.s32.totalorder %s167, 3
        %s169 = scalar_select %p168, %s167, 3
        %s170 = smul.addr %s169, 2
        %s171 = smul.addr %s170, 4
        %s172 = scalar_lea.vmem %s0, %s171
        %s173 = smul.u32 2, %s17
        %s174 = smul.u32 2, %s17
        %v175 = vld [vmem:[%s172] sm:$0xff]
        %v176 = vld [vmem:[%s172 + $0x8] sm:$0xff]
        %v177 = vld [vmem:[%s1] sm:$0xf]
        %v178 = vld [vmem:[%s1 + $0x4] sm:$0xf]
        %v179 = vld [vmem:[%s1 + $0x8] sm:$0xf]
        %v180 = vld [vmem:[%s1 + $0xc] sm:$0xf]
        %v181 = vld [vmem:[%s1 + $0x10] sm:$0xf]
        %v182 = vld [vmem:[%s1 + $0x14] sm:$0xf]
        %v183 = vld [vmem:[%s1 + $0x18] sm:$0xf]
        %v184 = vld [vmem:[%s1 + $0x1c] sm:$0xf]
        %v185 = vld [vmem:[%s1 + $0x20] sm:$0xf]
        %v186 = vld [vmem:[%s1 + $0x24] sm:$0xf]
        %v187 = vld [vmem:[%s1 + $0x28] sm:$0xf]
        %v188 = vld [vmem:[%s1 + $0x2c] sm:$0xf]
        %v189 = vld [vmem:[%s1 + $0x30] sm:$0xf]
        %v190 = vld [vmem:[%s1 + $0x34] sm:$0xf]
        %v191 = vld [vmem:[%s1 + $0x38] sm:$0xf]
        %v192 = vld [vmem:[%s1 + $0x3c] sm:$0xf]
        %v193 = vld [vmem:[%s1 + $0x40] sm:$0xf]
        %v194 = vld [vmem:[%s1 + $0x44] sm:$0xf]
        %v195 = vld [vmem:[%s1 + $0x48] sm:$0xf]
        %v196 = vld [vmem:[%s1 + $0x4c] sm:$0xf]
        %v197 = vld [vmem:[%s1 + $0x50] sm:$0xf]
        %v198 = vld [vmem:[%s1 + $0x54] sm:$0xf]
        %v199 = vld [vmem:[%s1 + $0x58] sm:$0xf]
        %v200 = vld [vmem:[%s1 + $0x5c] sm:$0xf]
        %v201 = vld [vmem:[%s1 + $0x60] sm:$0xf]
        %v202 = vld [vmem:[%s1 + $0x64] sm:$0xf]
        %v203 = vld [vmem:[%s1 + $0x68] sm:$0xf]
        %v204 = vld [vmem:[%s1 + $0x6c] sm:$0xf]
        %v205 = vld [vmem:[%s1 + $0x70] sm:$0xf]
        %v206 = vld [vmem:[%s1 + $0x74] sm:$0xf]
        %v207 = vld [vmem:[%s1 + $0x78] sm:$0xf]
        %v208 = vld [vmem:[%s1 + $0x7c] sm:$0xf]
        %v209 = vld [vmem:[%s2] sm:$0x1]
        %v211 = vperm.slane %v209, 0
        %v215 = vunpack.c.l.b16 %v175
        %v216 = vunpack.c.h.b16 %v175
        %v217 = vunpack.c.l.b16 %v176
        %v218 = vunpack.c.h.b16 %v176
        %v219 = vpack.c.b16 %v217, %v215
        %v220 = vpack.c.b16 %v218, %v216
        %v255 = vunpack.c.l.b16 %v177
        %v256 = vunpack.c.l.b16 %v178
        %v257 = vunpack.c.l.b16 %v179
        %v258 = vunpack.c.l.b16 %v180
        %v259 = vunpack.c.l.b16 %v181
        %v260 = vunpack.c.l.b16 %v182
        %v261 = vunpack.c.l.b16 %v183
        %v262 = vunpack.c.l.b16 %v184
        %v263 = vunpack.c.l.b16 %v185
        %v264 = vunpack.c.l.b16 %v186
        %v265 = vunpack.c.l.b16 %v187
        %v266 = vunpack.c.l.b16 %v188
        %v267 = vunpack.c.l.b16 %v189
        %v268 = vunpack.c.l.b16 %v190
        %v269 = vunpack.c.l.b16 %v191
        %v270 = vunpack.c.l.b16 %v192
        %v271 = vunpack.c.l.b16 %v193
        %v272 = vunpack.c.l.b16 %v194
        %v273 = vunpack.c.l.b16 %v195
        %v274 = vunpack.c.l.b16 %v196
        %v275 = vunpack.c.l.b16 %v197
        %v276 = vunpack.c.l.b16 %v198
        %v277 = vunpack.c.l.b16 %v199
        %v278 = vunpack.c.l.b16 %v200
        %v279 = vunpack.c.l.b16 %v201
        %v280 = vunpack.c.l.b16 %v202
        %v281 = vunpack.c.l.b16 %v203
        %v282 = vunpack.c.l.b16 %v204
        %v283 = vunpack.c.l.b16 %v205
        %v284 = vunpack.c.l.b16 %v206
        %v285 = vunpack.c.l.b16 %v207
        %v286 = vunpack.c.l.b16 %v208
        %v287 = vpack.c.b16 %v256, %v255
        %v288 = vpack.c.b16 %v258, %v257
        %v289 = vpack.c.b16 %v260, %v259
        %v290 = vpack.c.b16 %v262, %v261
        %v291 = vpack.c.b16 %v264, %v263
        %v292 = vpack.c.b16 %v266, %v265
        %v293 = vpack.c.b16 %v268, %v267
        %v294 = vpack.c.b16 %v270, %v269
        %v295 = vpack.c.b16 %v272, %v271
        %v296 = vpack.c.b16 %v274, %v273
        %v297 = vpack.c.b16 %v276, %v275
        %v298 = vpack.c.b16 %v278, %v277
        %v299 = vpack.c.b16 %v280, %v279
        %v300 = vpack.c.b16 %v282, %v281
        %v301 = vpack.c.b16 %v284, %v283
        %v302 = vpack.c.b16 %v286, %v285
        %319 = vmatpush.bf16.msra.mxu0 %v294
        %320 = vmatpush.bf16.msra.mxu0 %v293
        %321 = vmatpush.bf16.msra.mxu0 %v292
        %322 = vmatpush.bf16.msra.mxu0 %v291
        %323 = vmatpush.bf16.msra.mxu0 %v290
        %324 = vmatpush.bf16.msra.mxu0 %v289
        %325 = vmatpush.bf16.msra.mxu0 %v288
        %326 = vmatpush.bf16.msra.mxu0 %v287
        %327 = vmatmul.bf16.gmra.mxu0 %v219
        %v328 = vpop.f32.mrf.mxu0
        %v329 = vadd.f32 %v211, %v328
        %v330 = vpop.f32.mrf.mxu0
        %v331 = vadd.f32 %v211, %v330
        %332 = vdwg.mxu0
        %333 = vmatpush.bf16.msra.mxu0 %v302
        %334 = vmatpush.bf16.msra.mxu0 %v301
        %335 = vmatpush.bf16.msra.mxu0 %v300
        %336 = vmatpush.bf16.msra.mxu0 %v299
        %337 = vmatpush.bf16.msra.mxu0 %v298
        %338 = vmatpush.bf16.msra.mxu0 %v297
        %339 = vmatpush.bf16.msra.mxu0 %v296
        %340 = vmatpush.bf16.msra.mxu0 %v295
        %341 = vmatmul.bf16.gmra.mxu0 %v220
        %v342 = vpop.f32.mrf.mxu0
        %v343 = vadd.f32 %v329, %v342
        %v344 = vpop.f32.mrf.mxu0
        %v345 = vadd.f32 %v331, %v344
        %346 = vdwg.mxu0
        %v347 = vpack.c.bf16 %v343, %v343
        %v348 = vpack.c.bf16 %v345, %v345
        %349 = vst [vmem:[%s166] sm:$0xf] %v347
        %350 = vst [vmem:[%s166 + $0x4] sm:$0xf] %v348
        %s351 = sand.u32 %s93, 1
        %s352 = scalar_lea.sflag [#allocation3], %s351
        %s353 = sand.u32 %s93, 1
        %s354 = smul.addr %s353, 8
        %s355 = scalar_lea.vmem [#allocation2], %s354
        // Predicated region
        $region33: #{patch_embed_forward.1} parent=31 // pred_check
          %p356 = pneg %p103
        $region34: #{patch_embed_forward.1} parent=31 // pred_check_branch
          %358 = sbr.rel (%p356) target = $region36
        $region35: #{patch_embed_forward.1} parent=31 // pred_region
          %s359 = smul.u32 2, %s17
          %361 = vsyncadd %s352, 0
          %s362 = smul.addr %s359, 4
          %s363 = scalar_lea.hbm %s3, %s362
          %s364 = sshll.u32 %s355, 4
          %s365 = int_to_ptr.vmem [resolvable:$true] %s364
          %s366 = sshll.u32 %s363, 4
          %s367 = int_to_ptr.hbm [resolvable:$true] %s366
          %372 = dma.vmem_to_hbm [thread:$0]  %s365, 128, %s367, %s352, 64, 64, 4
        $region36: #{patch_embed_forward.1} parent=31 // pred_fallthru
          _
      $region32: #{patch_embed_forward.1} parent=5 // pred_fallthru
        _
      %p373 = scmp.le.s32.totalorder 2, %s12
      // Predicated region
      $region37: #{patch_embed_forward.1} parent=5 // pred_check
        %p374 = pneg %p373
      $region38: #{patch_embed_forward.1} parent=5 // pred_check_branch
        %376 = sbr.rel (%p374) target = $region40
      $region39: #{patch_embed_forward.1} parent=5 // pred_region
        %s377 = ssub.s32 %s12, 2
        // Predicated region
        $region41: #{patch_embed_forward.1} parent=39 // pred_check
          %p378 = pneg %p109
        $region42: #{patch_embed_forward.1} parent=39 // pred_check_branch
          %380 = sbr.rel (%p378) target = $region44
        $region43: #{patch_embed_forward.1} parent=39 // pred_region
          %s381 = sand.u32 %s94, 1
          %s382 = scalar_lea.sflag [#allocation3], %s381
          %s383 = sand.u32 %s94, 1
          %s384 = smul.addr %s383, 8
          %s385 = scalar_lea.vmem [#allocation2], %s384
          %387 = dma.done %s382, 128
        $region44: #{patch_embed_forward.1} parent=39 // pred_fallthru
          _
      $region40: #{patch_embed_forward.1} parent=5 // pred_fallthru
        _
    $region6: #{patch_embed_forward.1} parent=1 // loop_footer
      %s16 = sadd.s32 1, %s12
    $region7: #{patch_embed_forward.1} parent=1 // loop_footer_branch
      %11 = sbr.rel target = $region3
    $region8: #{patch_embed_forward.1} parent=1 // loop_exit
      _
    %388 = vsyncpa [#allocation3], 1
    %s389 = scalar_lea.sflag [#allocation3], 1
    %390 = vsyncpa %s389, 1

</llo_original>
